<compile_context>
chip_gen: v5e
topology: v5e:2x2
jax: 0.10.0
libtpu: 0.0.40
codegen_flags: <defaults>
</compile_context>

<pallas_src>
import functools

import jax
import jax.numpy as jnp
from jax.experimental import pallas as pl
from jax.experimental.pallas import tpu as pltpu


def _sbb_kernel(x_ref, w1_ref, b1_ref, w2_ref, b2_ref, w3_ref, b3_ref,
                w4_ref, b4_ref, o_ref, *, width):
    f32 = jnp.float32
    x = x_ref[0]                                   # (Cin, HW)
    hw = x.shape[-1]
    cm = w1_ref.shape[0]

    # Lane-position helpers (row-major p = h*W + w flattening).
    pos = jax.lax.broadcasted_iota(jnp.int32, (cm, hw), 1)
    wcol = pos % width                             # w coordinate of each lane

    # conv1: 1x1 + ReLU.
    h1 = jnp.dot(w1_ref[...], x, preferred_element_type=f32) + b1_ref[...]
    h1 = jnp.maximum(h1, 0.0)

    # conv2: (3,1) kernel, padding (1,0) -> taps at h-1 / h / h+1, i.e. lane
    # shifts by +-W (zero fill at the first / last image row).  Rolls are
    # circular, so the wrapped-in lanes are masked to zero.
    h1_m = jnp.where(pos >= width, pltpu.roll(h1, width, axis=1), 0.0)
    h1_p = jnp.where(pos < hw - width, pltpu.roll(h1, hw - width, axis=1), 0.0)
    h2 = jnp.dot(w2_ref[...],
                 jnp.concatenate([h1_m, h1, h1_p], axis=0),
                 preferred_element_type=f32) + b2_ref[...]
    h2 = jnp.maximum(h2, 0.0)

    # conv3: (1,3) kernel, padding (0,1) -> taps at w-1 / w / w+1, i.e. lane
    # shifts by +-1 with zero fill at the left / right edge of every row.
    h2_m = jnp.where(wcol != 0, pltpu.roll(h2, 1, axis=1), 0.0)
    h2_p = jnp.where(wcol != width - 1, pltpu.roll(h2, hw - 1, axis=1), 0.0)
    h3 = jnp.dot(w3_ref[...],
                 jnp.concatenate([h2_m, h2, h2_p], axis=0),
                 preferred_element_type=f32) + b3_ref[...]
    h3 = jnp.maximum(h3, 0.0)

    # conv4: 1x1 (no ReLU).
    out = jnp.dot(w4_ref[...], h3, preferred_element_type=f32) + b4_ref[...]
    o_ref[0] = out.astype(o_ref.dtype)


def small_basic_block_forward(x_nchw, params):
    """x_nchw: (N, Cin, H, W) float32 -> (N, Cout, H, W) float32."""
    w1, b1, w2, b2, w3, b3, w4, b4 = params
    N, Cin, H, W = x_nchw.shape
    Cm = w1.shape[1]
    Cout = w4.shape[1]
    HW = H * W

    # NCHW stays NCHW: just flatten the spatial dims onto the lane axis.
    x = x_nchw.reshape(N, Cin, HW)

    # Weight prep (once, outside the kernel): put output channels on sublanes
    # and fuse the 3 taps of each 3-wide conv into one (Cm, 3*Cm) matrix whose
    # column blocks are [tap h-1 | tap h | tap h+1] (resp. w-1/w/w+1).
    w1t = jnp.transpose(w1, (1, 0))                              # (Cm, Cin)
    w2f = jnp.transpose(w2, (2, 0, 1)).reshape(Cm, 3 * Cm)       # (Cm, 3*Cm)
    w3f = jnp.transpose(w3, (2, 0, 1)).reshape(Cm, 3 * Cm)       # (Cm, 3*Cm)
    w4t = jnp.transpose(w4, (1, 0))                              # (Cout, Cm)
    b1c = b1.reshape(Cm, 1)
    b2c = b2.reshape(Cm, 1)
    b3c = b3.reshape(Cm, 1)
    b4c = b4.reshape(Cout, 1)

    def full(arr):
        nd = arr.ndim
        return pl.BlockSpec(arr.shape, lambda i, _nd=nd: (0,) * _nd)

    kernel = functools.partial(_sbb_kernel, width=W)

    # Weights/biases use constant index maps, so they are DMA'd once in the
    # pipeline prologue and stay resident in VMEM across the batch grid.
    out = pl.pallas_call(
        kernel,
        out_shape=jax.ShapeDtypeStruct((N, Cout, HW), jnp.float32),
        grid=(N,),
        in_specs=[
            pl.BlockSpec((1, Cin, HW), lambda i: (i, 0, 0)),
            full(w1t), full(b1c), full(w2f), full(b2c),
            full(w3f), full(b3c), full(w4t), full(b4c),
        ],
        out_specs=pl.BlockSpec((1, Cout, HW), lambda i: (i, 0, 0)),
        compiler_params=pltpu.CompilerParams(
            dimension_semantics=("parallel",)),   # megacore splits the batch
    )(x, w1t, b1c, w2f, b2c, w3f, b3c, w4t, b4c)

    return out.reshape(N, Cout, H, W)


def reference_forward(x_nchw, params):
    """Plain-JAX NCHW reference matching the PyTorch module exactly."""
    w1, b1, w2, b2, w3, b3, w4, b4 = params
    dn = ('NCHW', 'OIHW', 'NCHW')

    def conv(x, k, pad):
        return jax.lax.conv_general_dilated(x, k, (1, 1), pad,
                                            dimension_numbers=dn)

    k1 = jnp.transpose(w1, (1, 0))[:, :, None, None]          # (O, I, 1, 1)
    k2 = jnp.transpose(w2, (2, 1, 0))[:, :, :, None]          # (O, I, 3, 1)
    k3 = jnp.transpose(w3, (2, 1, 0))[:, :, None, :]          # (O, I, 1, 3)
    k4 = jnp.transpose(w4, (1, 0))[:, :, None, None]          # (O, I, 1, 1)

    h = jax.nn.relu(conv(x_nchw, k1, [(0, 0), (0, 0)]) + b1[None, :, None, None])
    h = jax.nn.relu(conv(h, k2, [(1, 1), (0, 0)]) + b2[None, :, None, None])
    h = jax.nn.relu(conv(h, k3, [(0, 0), (1, 1)]) + b3[None, :, None, None])
    return conv(h, k4, [(0, 0), (0, 0)]) + b4[None, :, None, None]


if __name__ == "__main__":
    key = jax.random.PRNGKey(0)
    N, Cin, H, W = 2, 4, 16, 16      # batch=2, ch_in=4, spatial=16x16
    Cout = 32                        # ch_out=32 -> mid channels 8
    Cm = Cout // 4

    ks = jax.random.split(key, 9)
    x = jax.random.normal(ks[0], (N, Cin, H, W), jnp.float32)
    # Deterministic synthetic parameters (matrix layout [cin, cout] / [tap, cin, cout]).
    w1 = jax.random.normal(ks[1], (Cin, Cm), jnp.float32) * 0.2
    b1 = jax.random.normal(ks[2], (Cm,), jnp.float32) * 0.1
    w2 = jax.random.normal(ks[3], (3, Cm, Cm), jnp.float32) * 0.2
    b2 = jax.random.normal(ks[4], (Cm,), jnp.float32) * 0.1
    w3 = jax.random.normal(ks[5], (3, Cm, Cm), jnp.float32) * 0.2
    b3 = jax.random.normal(ks[6], (Cm,), jnp.float32) * 0.1
    w4 = jax.random.normal(ks[7], (Cm, Cout), jnp.float32) * 0.2
    b4 = jax.random.normal(ks[8], (Cout,), jnp.float32) * 0.1
    params = (w1, b1, w2, b2, w3, b3, w4, b4)

    out = small_basic_block_forward(x, params)
    out = jax.block_until_ready(out)

    ref = reference_forward(x, params)
    assert out.shape == (N, Cout, H, W), out.shape
    if not jnp.allclose(out, ref, rtol=1e-4, atol=1e-4):
        raise AssertionError("Pallas kernel output mismatches reference conv")
    print("KERNEL_OK")
</pallas_src>

<mosaic_0001>
module attributes {stable_mosaic.version = 11 : i64} {
  func.func @_sbb_kernel(%arg0: i32, %arg1: memref<1x4x256xf32, #tpu.memory_space<vmem>>, %arg2: memref<8x4xf32, #tpu.memory_space<vmem>>, %arg3: memref<8x1xf32, #tpu.memory_space<vmem>>, %arg4: memref<8x24xf32, #tpu.memory_space<vmem>>, %arg5: memref<8x1xf32, #tpu.memory_space<vmem>>, %arg6: memref<8x24xf32, #tpu.memory_space<vmem>>, %arg7: memref<8x1xf32, #tpu.memory_space<vmem>>, %arg8: memref<32x8xf32, #tpu.memory_space<vmem>>, %arg9: memref<32x1xf32, #tpu.memory_space<vmem>>, %arg10: memref<1x32x256xf32, #tpu.memory_space<vmem>>) attributes {dimension_semantics = [#tpu.dimension_semantics<parallel>], iteration_bounds = array<i64: 2>, scalar_prefetch = 0 : i64, scratch_operands = 0 : i64, tpu.core_type = #tpu.core_type<tc>, window_params = [{transform_indices = @transform_0, window_bounds = array<i64: 1, 4, 256>}, {pipeline_mode = #tpu.pipeline_mode<synchronous>, transform_indices = @transform_1, window_bounds = array<i64: 8, 4>}, {pipeline_mode = #tpu.pipeline_mode<synchronous>, transform_indices = @transform_2, window_bounds = array<i64: 8, 1>}, {pipeline_mode = #tpu.pipeline_mode<synchronous>, transform_indices = @transform_3, window_bounds = array<i64: 8, 24>}, {pipeline_mode = #tpu.pipeline_mode<synchronous>, transform_indices = @transform_4, window_bounds = array<i64: 8, 1>}, {pipeline_mode = #tpu.pipeline_mode<synchronous>, transform_indices = @transform_5, window_bounds = array<i64: 8, 24>}, {pipeline_mode = #tpu.pipeline_mode<synchronous>, transform_indices = @transform_6, window_bounds = array<i64: 8, 1>}, {pipeline_mode = #tpu.pipeline_mode<synchronous>, transform_indices = @transform_7, window_bounds = array<i64: 32, 8>}, {pipeline_mode = #tpu.pipeline_mode<synchronous>, transform_indices = @transform_8, window_bounds = array<i64: 32, 1>}, {transform_indices = @transform_9, window_bounds = array<i64: 1, 32, 256>}]} {
    %c0 = arith.constant 0 : index
    %c0_0 = arith.constant 0 : index
    %c0_1 = arith.constant 0 : index
    %0 = vector.load %arg1[%c0, %c0_0, %c0_1] : memref<1x4x256xf32, #tpu.memory_space<vmem>>, vector<1x4x256xf32>
    %1 = vector.shape_cast %0 : vector<1x4x256xf32> to vector<4x256xf32>
    %2 = tpu.iota {dimensions = array<i32: 1>} : vector<8x256xi32>
    %c16_i32 = arith.constant 16 : i32
    %c0_i32 = arith.constant 0 : i32
    %3 = arith.cmpi eq, %c16_i32, %c0_i32 : i32
    %c1_i32 = arith.constant 1 : i32
    %4 = arith.select %3, %c1_i32, %c16_i32 : i32
    %5 = vector.broadcast %4 : i32 to vector<8x256xi32>
    %6 = arith.remsi %2, %5 : vector<8x256xi32>
    %c0_i32_2 = arith.constant 0 : i32
    %7 = vector.broadcast %c0_i32_2 : i32 to vector<8x256xi32>
    %8 = arith.cmpi ne, %6, %7 : vector<8x256xi32>
    %c0_i32_3 = arith.constant 0 : i32
    %9 = vector.broadcast %c0_i32_3 : i32 to vector<8x256xi32>
    %10 = arith.cmpi slt, %6, %9 : vector<8x256xi32>
    %c0_i32_4 = arith.constant 0 : i32
    %11 = arith.cmpi slt, %4, %c0_i32_4 : i32
    %12 = vector.broadcast %11 : i1 to vector<8x256xi1>
    %13 = vector.broadcast %12 : vector<8x256xi1> to vector<8x256xi1>
    %14 = arith.xori %10, %13 : vector<8x256xi1>
    %15 = arith.andi %14, %8 : vector<8x256xi1>
    %16 = vector.broadcast %4 : i32 to vector<8x256xi32>
    %17 = arith.addi %6, %16 : vector<8x256xi32>
    %18 = arith.select %15, %17, %6 : vector<8x256xi1>, vector<8x256xi32>
    %c0_5 = arith.constant 0 : index
    %c0_6 = arith.constant 0 : index
    %19 = vector.load %arg2[%c0_5, %c0_6] : memref<8x4xf32, #tpu.memory_space<vmem>>, vector<8x4xf32>
    %cst = arith.constant dense<0.000000e+00> : vector<8x256xf32>
    %20 = tpu.matmul %19, %1, %cst {dimension_numbers = #tpu.dot_dimension_numbers<[1], [0], [0], [1], [0, 0, 1, 1], [], []>} : vector<8x4xf32>, vector<4x256xf32>, vector<8x256xf32> -> vector<8x256xf32>
    %c0_7 = arith.constant 0 : index
    %c0_8 = arith.constant 0 : index
    %21 = vector.load %arg3[%c0_7, %c0_8] : memref<8x1xf32, #tpu.memory_space<vmem>>, vector<8x1xf32>
    %22 = vector.broadcast %21 : vector<8x1xf32> to vector<8x256xf32>
    %23 = arith.addf %20, %22 : vector<8x256xf32>
    %cst_9 = arith.constant 0.000000e+00 : f32
    %24 = vector.broadcast %cst_9 : f32 to vector<8x256xf32>
    %25 = arith.maximumf %23, %24 : vector<8x256xf32>
    %c16_i32_10 = arith.constant 16 : i32
    %26 = vector.broadcast %c16_i32_10 : i32 to vector<8x256xi32>
    %27 = arith.cmpi sge, %2, %26 : vector<8x256xi32>
    %c16_i32_11 = arith.constant 16 : i32
    %28 = tpu.dynamic_rotate %25 by %c16_i32_11 dim 1 : vector<8x256xf32>, i32 -> vector<8x256xf32>
    %cst_12 = arith.constant 0.000000e+00 : f32
    %29 = vector.broadcast %cst_12 : f32 to vector<8x256xf32>
    %30 = arith.select %27, %28, %29 : vector<8x256xi1>, vector<8x256xf32>
    %c240_i32 = arith.constant 240 : i32
    %31 = vector.broadcast %c240_i32 : i32 to vector<8x256xi32>
    %32 = arith.cmpi slt, %2, %31 : vector<8x256xi32>
    %c240_i32_13 = arith.constant 240 : i32
    %33 = tpu.dynamic_rotate %25 by %c240_i32_13 dim 1 : vector<8x256xf32>, i32 -> vector<8x256xf32>
    %cst_14 = arith.constant 0.000000e+00 : f32
    %34 = vector.broadcast %cst_14 : f32 to vector<8x256xf32>
    %35 = arith.select %32, %33, %34 : vector<8x256xi1>, vector<8x256xf32>
    %c0_15 = arith.constant 0 : index
    %c0_16 = arith.constant 0 : index
    %36 = vector.load %arg4[%c0_15, %c0_16] : memref<8x24xf32, #tpu.memory_space<vmem>>, vector<8x24xf32>
    %37 = tpu.concatenate %30, %25, %35 in 0 : vector<8x256xf32>, vector<8x256xf32>, vector<8x256xf32> -> vector<24x256xf32>
    %cst_17 = arith.constant dense<0.000000e+00> : vector<8x256xf32>
    %38 = tpu.matmul %36, %37, %cst_17 {dimension_numbers = #tpu.dot_dimension_numbers<[1], [0], [0], [1], [0, 0, 1, 1], [], []>} : vector<8x24xf32>, vector<24x256xf32>, vector<8x256xf32> -> vector<8x256xf32>
    %c0_18 = arith.constant 0 : index
    %c0_19 = arith.constant 0 : index
    %39 = vector.load %arg5[%c0_18, %c0_19] : memref<8x1xf32, #tpu.memory_space<vmem>>, vector<8x1xf32>
    %40 = vector.broadcast %39 : vector<8x1xf32> to vector<8x256xf32>
    %41 = arith.addf %38, %40 : vector<8x256xf32>
    %cst_20 = arith.constant 0.000000e+00 : f32
    %42 = vector.broadcast %cst_20 : f32 to vector<8x256xf32>
    %43 = arith.maximumf %41, %42 : vector<8x256xf32>
    %c0_i32_21 = arith.constant 0 : i32
    %44 = vector.broadcast %c0_i32_21 : i32 to vector<8x256xi32>
    %45 = arith.cmpi ne, %18, %44 : vector<8x256xi32>
    %c1_i32_22 = arith.constant 1 : i32
    %46 = tpu.dynamic_rotate %43 by %c1_i32_22 dim 1 : vector<8x256xf32>, i32 -> vector<8x256xf32>
    %cst_23 = arith.constant 0.000000e+00 : f32
    %47 = vector.broadcast %cst_23 : f32 to vector<8x256xf32>
    %48 = arith.select %45, %46, %47 : vector<8x256xi1>, vector<8x256xf32>
    %c15_i32 = arith.constant 15 : i32
    %49 = vector.broadcast %c15_i32 : i32 to vector<8x256xi32>
    %50 = arith.cmpi ne, %18, %49 : vector<8x256xi32>
    %c255_i32 = arith.constant 255 : i32
    %51 = tpu.dynamic_rotate %43 by %c255_i32 dim 1 : vector<8x256xf32>, i32 -> vector<8x256xf32>
    %cst_24 = arith.constant 0.000000e+00 : f32
    %52 = vector.broadcast %cst_24 : f32 to vector<8x256xf32>
    %53 = arith.select %50, %51, %52 : vector<8x256xi1>, vector<8x256xf32>
    %c0_25 = arith.constant 0 : index
    %c0_26 = arith.constant 0 : index
    %54 = vector.load %arg6[%c0_25, %c0_26] : memref<8x24xf32, #tpu.memory_space<vmem>>, vector<8x24xf32>
    %55 = tpu.concatenate %48, %43, %53 in 0 : vector<8x256xf32>, vector<8x256xf32>, vector<8x256xf32> -> vector<24x256xf32>
    %cst_27 = arith.constant dense<0.000000e+00> : vector<8x256xf32>
    %56 = tpu.matmul %54, %55, %cst_27 {dimension_numbers = #tpu.dot_dimension_numbers<[1], [0], [0], [1], [0, 0, 1, 1], [], []>} : vector<8x24xf32>, vector<24x256xf32>, vector<8x256xf32> -> vector<8x256xf32>
    %c0_28 = arith.constant 0 : index
    %c0_29 = arith.constant 0 : index
    %57 = vector.load %arg7[%c0_28, %c0_29] : memref<8x1xf32, #tpu.memory_space<vmem>>, vector<8x1xf32>
    %58 = vector.broadcast %57 : vector<8x1xf32> to vector<8x256xf32>
    %59 = arith.addf %56, %58 : vector<8x256xf32>
    %cst_30 = arith.constant 0.000000e+00 : f32
    %60 = vector.broadcast %cst_30 : f32 to vector<8x256xf32>
    %61 = arith.maximumf %59, %60 : vector<8x256xf32>
    %c0_31 = arith.constant 0 : index
    %c0_32 = arith.constant 0 : index
    %62 = vector.load %arg8[%c0_31, %c0_32] : memref<32x8xf32, #tpu.memory_space<vmem>>, vector<32x8xf32>
    %cst_33 = arith.constant dense<0.000000e+00> : vector<32x256xf32>
    %63 = tpu.matmul %62, %61, %cst_33 {dimension_numbers = #tpu.dot_dimension_numbers<[1], [0], [0], [1], [0, 0, 1, 1], [], []>} : vector<32x8xf32>, vector<8x256xf32>, vector<32x256xf32> -> vector<32x256xf32>
    %c0_34 = arith.constant 0 : index
    %c0_35 = arith.constant 0 : index
    %64 = vector.load %arg9[%c0_34, %c0_35] : memref<32x1xf32, #tpu.memory_space<vmem>>, vector<32x1xf32>
    %65 = vector.broadcast %64 : vector<32x1xf32> to vector<32x256xf32>
    %66 = arith.addf %63, %65 : vector<32x256xf32>
    %c0_36 = arith.constant 0 : index
    %c0_37 = arith.constant 0 : index
    %c0_38 = arith.constant 0 : index
    %67 = vector.load %arg10[%c0_36, %c0_37, %c0_38] : memref<1x32x256xf32, #tpu.memory_space<vmem>>, vector<1x32x256xf32>
    %68 = vector.shape_cast %67 : vector<1x32x256xf32> to vector<32x256xf32>
    %69 = vector.shape_cast %66 : vector<32x256xf32> to vector<1x32x256xf32>
    tpu.vector_store %arg10[%c0_36, %c0_37, %c0_38], %69 {strides = array<i32>} : memref<1x32x256xf32, #tpu.memory_space<vmem>>, vector<1x32x256xf32>,
    return
  }
  func.func @transform_0(%arg0: i32) -> (i32, i32, i32) {
    %c0_i32 = arith.constant 0 : i32
    %c0_i32_0 = arith.constant 0 : i32
    %c0_i32_1 = arith.constant 0 : i32
    return %arg0, %c0_i32, %c0_i32_0 : i32, i32, i32
  }
  func.func @transform_1(%arg0: i32) -> (i32, i32) {
    %c0_i32 = arith.constant 0 : i32
    %c0_i32_0 = arith.constant 0 : i32
    %c0_i32_1 = arith.constant 0 : i32
    return %c0_i32, %c0_i32_0 : i32, i32
  }
  func.func @transform_2(%arg0: i32) -> (i32, i32) {
    %c0_i32 = arith.constant 0 : i32
    %c0_i32_0 = arith.constant 0 : i32
    %c0_i32_1 = arith.constant 0 : i32
    return %c0_i32, %c0_i32_0 : i32, i32
  }
  func.func @transform_3(%arg0: i32) -> (i32, i32) {
    %c0_i32 = arith.constant 0 : i32
    %c0_i32_0 = arith.constant 0 : i32
    %c0_i32_1 = arith.constant 0 : i32
    return %c0_i32, %c0_i32_0 : i32, i32
  }
  func.func @transform_4(%arg0: i32) -> (i32, i32) {
    %c0_i32 = arith.constant 0 : i32
    %c0_i32_0 = arith.constant 0 : i32
    %c0_i32_1 = arith.constant 0 : i32
    return %c0_i32, %c0_i32_0 : i32, i32
  }
  func.func @transform_5(%arg0: i32) -> (i32, i32) {
    %c0_i32 = arith.constant 0 : i32
    %c0_i32_0 = arith.constant 0 : i32
    %c0_i32_1 = arith.constant 0 : i32
    return %c0_i32, %c0_i32_0 : i32, i32
  }
  func.func @transform_6(%arg0: i32) -> (i32, i32) {
    %c0_i32 = arith.constant 0 : i32
    %c0_i32_0 = arith.constant 0 : i32
    %c0_i32_1 = arith.constant 0 : i32
    return %c0_i32, %c0_i32_0 : i32, i32
  }
  func.func @transform_7(%arg0: i32) -> (i32, i32) {
    %c0_i32 = arith.constant 0 : i32
    %c0_i32_0 = arith.constant 0 : i32
    %c0_i32_1 = arith.constant 0 : i32
    return %c0_i32, %c0_i32_0 : i32, i32
  }
  func.func @transform_8(%arg0: i32) -> (i32, i32) {
    %c0_i32 = arith.constant 0 : i32
    %c0_i32_0 = arith.constant 0 : i32
    %c0_i32_1 = arith.constant 0 : i32
    return %c0_i32, %c0_i32_0 : i32, i32
  }
  func.func @transform_9(%arg0: i32) -> (i32, i32, i32) {
    %c0_i32 = arith.constant 0 : i32
    %c0_i32_0 = arith.constant 0 : i32
    %c0_i32_1 = arith.constant 0 : i32
    return %arg0, %c0_i32, %c0_i32_0 : i32, i32, i32
  }
}

</mosaic_0001>

<llo_original>
// kernel: tpu_custom_call.1
$region0: #{tpu_custom_call.1}
  #allocation0 [shape = 'u32[]', space=smem, size = 0x4, offset = 0x4, fixed_abs, tag = 'smem constant byte address 0x4 - core index']
  #allocation1 [shape = 'u32[72,128]{1,0:T(1,128)}', space=vmem, size = 0x9000, scoped, tag = 'internal scratch']
  %s0 = inlined_call_operand.vmem [shape: f32[2,4,256], index: 0, kind: input, shape index: {}]
  %s1 = inlined_call_operand.vmem [shape: f32[8,4], index: 1, kind: input, shape index: {}]
  %s2 = inlined_call_operand.vmem [shape: f32[8,1], index: 2, kind: input, shape index: {}]
  %s3 = inlined_call_operand.vmem [shape: f32[8,24], index: 3, kind: input, shape index: {}]
  %s4 = inlined_call_operand.vmem [shape: f32[8,1], index: 4, kind: input, shape index: {}]
  %s5 = inlined_call_operand.vmem [shape: f32[8,24], index: 5, kind: input, shape index: {}]
  %s6 = inlined_call_operand.vmem [shape: f32[8,1], index: 6, kind: input, shape index: {}]
  %s7 = inlined_call_operand.vmem [shape: f32[32,8], index: 7, kind: input, shape index: {}]
  %s8 = inlined_call_operand.vmem [shape: f32[32,1], index: 8, kind: input, shape index: {}]
  %s9 = inlined_call_operand.hbm [shape: f32[2,32,256], index: 9, kind: output, shape index: {}]
  %s10 = sld [smem:[#allocation0]]
  $region69: #{tpu_custom_call.1} parent=0
    _
  %s12 = ssub.s32 1, %s10
  %s13 = scalar_select 0, %s12, %s10
  $region1: #{tpu_custom_call.1} parent=0
    #allocation2 [shape = 'u8[65536]{0}', space=vmem, size = 0x10000, scoped, tag = 'output window, operand 0']
    #allocation3 [shape = 's32[2]{0}', space=sflag, size = 0x8, scoped, tag = 'scoped memory for tpu_custom_call.1']
    %14 = vsyncpa [#allocation3], 0
    %s15 = scalar_lea.sflag [#allocation3], 1
    %16 = vsyncpa %s15, 0
    loop: start=0, step=1, limit=4
    $region2: #{tpu_custom_call.1} parent=1 // loop_pre_header
      _
    $region3: #{tpu_custom_call.1} parent=1 // loop_header
      %s18 = sphi 0, %s22
      %p19 = scmp.ge.s32.totalorder %s18, 4
      %s28 = sphi 0, %s30
      %s31 = sphi 0, %s28
      %s32 = sphi 0, %s31
      %s48 = sphi 0, %s32
      %s52 = sphi 0, %s52
      %s54 = sphi 0, %s52
      %s55 = sphi 0, %s54
      %s69 = sphi 0, %s55
      %s73 = sphi 0, %s73
      %s75 = sphi 0, %s73
      %s76 = sphi 0, %s75
      %s90 = sphi 0, %s76
      %s94 = sphi 0, %s94
      %s96 = sphi 0, %s94
      %s97 = sphi 0, %s96
      %s111 = sphi 0, %s97
      %s115 = sphi 0, %s115
      %s117 = sphi 0, %s115
      %s118 = sphi 0, %s117
      %s132 = sphi 0, %s118
      %s136 = sphi 0, %s136
      %s138 = sphi 0, %s136
      %s139 = sphi 0, %s138
      %s153 = sphi 0, %s139
      %s157 = sphi 0, %s157
      %s159 = sphi 0, %s157
      %s160 = sphi 0, %s159
      %s174 = sphi 0, %s160
      %s178 = sphi 0, %s178
      %s180 = sphi 0, %s178
      %s181 = sphi 0, %s180
      %s195 = sphi 0, %s181
      %s199 = sphi 0, %s199
      %s201 = sphi 0, %s199
      %s202 = sphi 0, %s201
      %s216 = sphi 0, %s202
      %s222 = sphi 0, %s224
      %s225 = sphi 0, %s222
      %s226 = sphi 0, %s225
      %s242 = sphi 0, %s226
    $region4: #{tpu_custom_call.1} parent=1 // loop_header_branch
      %21 = sbr.rel (%p19) target = $region8
    $region5: #{tpu_custom_call.1} parent=1 // loop_body
      %s23 = ssub.s32 %s18, 1
      %s24 = ssub.s32 %s18, 2
      %s25 = sadd.s32 %s18, 1
      %s26 = ssub.s32 %s18, %s25
      %p27 = scmp.eq.s32.totalorder %s26, 0
      %s29 = sadd.s32 %s28, 1
      %s30 = scalar_select %p27, %s28, %s29
      %p33 = pneg %p27
      %p34 = scmp.eq.s32.totalorder %s18, 1
      %p35 = por %p33, %p34
      %p36 = scmp.ne.s32.totalorder %s28, %s31
      %p37 = scmp.eq.s32.totalorder %s18, 0
      %p38 = por %p36, %p37
      %p39 = scmp.ne.s32.totalorder %s28, %s31
      %p40 = scmp.eq.s32.totalorder %s23, 1
      %p41 = por %p39, %p40
      %p42 = scmp.ne.s32.totalorder %s31, %s32
      %p43 = scmp.eq.s32.totalorder %s23, 0
      %p44 = por %p42, %p43
      %p45 = scmp.ne.s32.totalorder %s31, %s32
      %p46 = scmp.eq.s32.totalorder %s24, 1
      %p47 = por %p45, %p46
      %p49 = scmp.ne.s32.totalorder %s32, %s48
      %p50 = scmp.eq.s32.totalorder %s24, 0
      %p51 = por %p49, %p50
      %s53 = sadd.s32 %s52, 1
      %p56 = scmp.eq.s32.totalorder %s18, 1
      %p57 = scmp.ne.s32.totalorder %s52, %s54
      %p58 = scmp.eq.s32.totalorder %s18, 0
      %p59 = por %p57, %p58
      %p60 = scmp.ne.s32.totalorder %s52, %s54
      %p61 = scmp.eq.s32.totalorder %s23, 1
      %p62 = por %p60, %p61
      %p63 = scmp.ne.s32.totalorder %s54, %s55
      %p64 = scmp.eq.s32.totalorder %s23, 0
      %p65 = por %p63, %p64
      %p66 = scmp.ne.s32.totalorder %s54, %s55
      %p67 = scmp.eq.s32.totalorder %s24, 1
      %p68 = por %p66, %p67
      %p70 = scmp.ne.s32.totalorder %s55, %s69
      %p71 = scmp.eq.s32.totalorder %s24, 0
      %p72 = por %p70, %p71
      %s74 = sadd.s32 %s73, 1
      %p77 = scmp.eq.s32.totalorder %s18, 1
      %p78 = scmp.ne.s32.totalorder %s73, %s75
      %p79 = scmp.eq.s32.totalorder %s18, 0
      %p80 = por %p78, %p79
      %p81 = scmp.ne.s32.totalorder %s73, %s75
      %p82 = scmp.eq.s32.totalorder %s23, 1
      %p83 = por %p81, %p82
      %p84 = scmp.ne.s32.totalorder %s75, %s76
      %p85 = scmp.eq.s32.totalorder %s23, 0
      %p86 = por %p84, %p85
      %p87 = scmp.ne.s32.totalorder %s75, %s76
      %p88 = scmp.eq.s32.totalorder %s24, 1
      %p89 = por %p87, %p88
      %p91 = scmp.ne.s32.totalorder %s76, %s90
      %p92 = scmp.eq.s32.totalorder %s24, 0
      %p93 = por %p91, %p92
      %s95 = sadd.s32 %s94, 1
      %p98 = scmp.eq.s32.totalorder %s18, 1
      %p99 = scmp.ne.s32.totalorder %s94, %s96
      %p100 = scmp.eq.s32.totalorder %s18, 0
      %p101 = por %p99, %p100
      %p102 = scmp.ne.s32.totalorder %s94, %s96
      %p103 = scmp.eq.s32.totalorder %s23, 1
      %p104 = por %p102, %p103
      %p105 = scmp.ne.s32.totalorder %s96, %s97
      %p106 = scmp.eq.s32.totalorder %s23, 0
      %p107 = por %p105, %p106
      %p108 = scmp.ne.s32.totalorder %s96, %s97
      %p109 = scmp.eq.s32.totalorder %s24, 1
      %p110 = por %p108, %p109
      %p112 = scmp.ne.s32.totalorder %s97, %s111
      %p113 = scmp.eq.s32.totalorder %s24, 0
      %p114 = por %p112, %p113
      %s116 = sadd.s32 %s115, 1
      %p119 = scmp.eq.s32.totalorder %s18, 1
      %p120 = scmp.ne.s32.totalorder %s115, %s117
      %p121 = scmp.eq.s32.totalorder %s18, 0
      %p122 = por %p120, %p121
      %p123 = scmp.ne.s32.totalorder %s115, %s117
      %p124 = scmp.eq.s32.totalorder %s23, 1
      %p125 = por %p123, %p124
      %p126 = scmp.ne.s32.totalorder %s117, %s118
      %p127 = scmp.eq.s32.totalorder %s23, 0
      %p128 = por %p126, %p127
      %p129 = scmp.ne.s32.totalorder %s117, %s118
      %p130 = scmp.eq.s32.totalorder %s24, 1
      %p131 = por %p129, %p130
      %p133 = scmp.ne.s32.totalorder %s118, %s132
      %p134 = scmp.eq.s32.totalorder %s24, 0
      %p135 = por %p133, %p134
      %s137 = sadd.s32 %s136, 1
      %p140 = scmp.eq.s32.totalorder %s18, 1
      %p141 = scmp.ne.s32.totalorder %s136, %s138
      %p142 = scmp.eq.s32.totalorder %s18, 0
      %p143 = por %p141, %p142
      %p144 = scmp.ne.s32.totalorder %s136, %s138
      %p145 = scmp.eq.s32.totalorder %s23, 1
      %p146 = por %p144, %p145
      %p147 = scmp.ne.s32.totalorder %s138, %s139
      %p148 = scmp.eq.s32.totalorder %s23, 0
      %p149 = por %p147, %p148
      %p150 = scmp.ne.s32.totalorder %s138, %s139
      %p151 = scmp.eq.s32.totalorder %s24, 1
      %p152 = por %p150, %p151
      %p154 = scmp.ne.s32.totalorder %s139, %s153
      %p155 = scmp.eq.s32.totalorder %s24, 0
      %p156 = por %p154, %p155
      %s158 = sadd.s32 %s157, 1
      %p161 = scmp.eq.s32.totalorder %s18, 1
      %p162 = scmp.ne.s32.totalorder %s157, %s159
      %p163 = scmp.eq.s32.totalorder %s18, 0
      %p164 = por %p162, %p163
      %p165 = scmp.ne.s32.totalorder %s157, %s159
      %p166 = scmp.eq.s32.totalorder %s23, 1
      %p167 = por %p165, %p166
      %p168 = scmp.ne.s32.totalorder %s159, %s160
      %p169 = scmp.eq.s32.totalorder %s23, 0
      %p170 = por %p168, %p169
      %p171 = scmp.ne.s32.totalorder %s159, %s160
      %p172 = scmp.eq.s32.totalorder %s24, 1
      %p173 = por %p171, %p172
      %p175 = scmp.ne.s32.totalorder %s160, %s174
      %p176 = scmp.eq.s32.totalorder %s24, 0
      %p177 = por %p175, %p176
      %s179 = sadd.s32 %s178, 1
      %p182 = scmp.eq.s32.totalorder %s18, 1
      %p183 = scmp.ne.s32.totalorder %s178, %s180
      %p184 = scmp.eq.s32.totalorder %s18, 0
      %p185 = por %p183, %p184
      %p186 = scmp.ne.s32.totalorder %s178, %s180
      %p187 = scmp.eq.s32.totalorder %s23, 1
      %p188 = por %p186, %p187
      %p189 = scmp.ne.s32.totalorder %s180, %s181
      %p190 = scmp.eq.s32.totalorder %s23, 0
      %p191 = por %p189, %p190
      %p192 = scmp.ne.s32.totalorder %s180, %s181
      %p193 = scmp.eq.s32.totalorder %s24, 1
      %p194 = por %p192, %p193
      %p196 = scmp.ne.s32.totalorder %s181, %s195
      %p197 = scmp.eq.s32.totalorder %s24, 0
      %p198 = por %p196, %p197
      %s200 = sadd.s32 %s199, 1
      %p203 = scmp.eq.s32.totalorder %s18, 1
      %p204 = scmp.ne.s32.totalorder %s199, %s201
      %p205 = scmp.eq.s32.totalorder %s18, 0
      %p206 = por %p204, %p205
      %p207 = scmp.ne.s32.totalorder %s199, %s201
      %p208 = scmp.eq.s32.totalorder %s23, 1
      %p209 = por %p207, %p208
      %p210 = scmp.ne.s32.totalorder %s201, %s202
      %p211 = scmp.eq.s32.totalorder %s23, 0
      %p212 = por %p210, %p211
      %p213 = scmp.ne.s32.totalorder %s201, %s202
      %p214 = scmp.eq.s32.totalorder %s24, 1
      %p215 = por %p213, %p214
      %p217 = scmp.ne.s32.totalorder %s202, %s216
      %p218 = scmp.eq.s32.totalorder %s24, 0
      %p219 = por %p217, %p218
      %s220 = ssub.s32 %s18, %s25
      %p221 = scmp.eq.s32.totalorder %s220, 0
      %s223 = sadd.s32 %s222, 1
      %s224 = scalar_select %p221, %s222, %s223
      %p227 = pneg %p221
      %p228 = scmp.eq.s32.totalorder %s18, 1
      %p229 = por %p227, %p228
      %p230 = scmp.ne.s32.totalorder %s222, %s225
      %p231 = scmp.eq.s32.totalorder %s18, 0
      %p232 = por %p230, %p231
      %p233 = scmp.ne.s32.totalorder %s222, %s225
      %p234 = scmp.eq.s32.totalorder %s23, 1
      %p235 = por %p233, %p234
      %p236 = scmp.ne.s32.totalorder %s225, %s226
      %p237 = scmp.eq.s32.totalorder %s23, 0
      %p238 = por %p236, %p237
      %p239 = scmp.ne.s32.totalorder %s225, %s226
      %p240 = scmp.eq.s32.totalorder %s24, 1
      %p241 = por %p239, %p240
      %p243 = scmp.ne.s32.totalorder %s226, %s242
      %p244 = scmp.eq.s32.totalorder %s24, 0
      %p245 = por %p243, %p244
      %p246 = scmp.le.s32.totalorder 1, %s18
      %p247 = scmp.lt.s32.totalorder %s18, 3
      %p248 = pnand %p246, %p247
      %p249 = pneg %p248
      // Predicated region
      $region9: #{tpu_custom_call.1} parent=5 // pred_check
        _
      $region10: #{tpu_custom_call.1} parent=5 // pred_check_branch
        %251 = sbr.rel (%p248) target = $region12
      $region11: #{tpu_custom_call.1} parent=5 // pred_region
        %s252 = ssub.s32 %s18, 1
        // Predicated region
        $region13: #{tpu_custom_call.1} parent=11 // pred_check
          %p253 = pneg %p65
        $region14: #{tpu_custom_call.1} parent=11 // pred_check_branch
          %255 = sbr.rel (%p253) target = $region16
        $region15: #{tpu_custom_call.1} parent=11 // pred_region
          _
        $region16: #{tpu_custom_call.1} parent=11 // pred_fallthru
          _
        // Predicated region
        $region17: #{tpu_custom_call.1} parent=11 // pred_check
          %p256 = pneg %p86
        $region18: #{tpu_custom_call.1} parent=11 // pred_check_branch
          %258 = sbr.rel (%p256) target = $region20
        $region19: #{tpu_custom_call.1} parent=11 // pred_region
          _
        $region20: #{tpu_custom_call.1} parent=11 // pred_fallthru
          _
        // Predicated region
        $region21: #{tpu_custom_call.1} parent=11 // pred_check
          %p259 = pneg %p107
        $region22: #{tpu_custom_call.1} parent=11 // pred_check_branch
          %261 = sbr.rel (%p259) target = $region24
        $region23: #{tpu_custom_call.1} parent=11 // pred_region
          _
        $region24: #{tpu_custom_call.1} parent=11 // pred_fallthru
          _
        // Predicated region
        $region25: #{tpu_custom_call.1} parent=11 // pred_check
          %p262 = pneg %p128
        $region26: #{tpu_custom_call.1} parent=11 // pred_check_branch
          %264 = sbr.rel (%p262) target = $region28
        $region27: #{tpu_custom_call.1} parent=11 // pred_region
          _
        $region28: #{tpu_custom_call.1} parent=11 // pred_fallthru
          _
        // Predicated region
        $region29: #{tpu_custom_call.1} parent=11 // pred_check
          %p265 = pneg %p149
        $region30: #{tpu_custom_call.1} parent=11 // pred_check_branch
          %267 = sbr.rel (%p265) target = $region32
        $region31: #{tpu_custom_call.1} parent=11 // pred_region
          _
        $region32: #{tpu_custom_call.1} parent=11 // pred_fallthru
          _
        // Predicated region
        $region33: #{tpu_custom_call.1} parent=11 // pred_check
          %p268 = pneg %p170
        $region34: #{tpu_custom_call.1} parent=11 // pred_check_branch
          %270 = sbr.rel (%p268) target = $region36
        $region35: #{tpu_custom_call.1} parent=11 // pred_region
          _
        $region36: #{tpu_custom_call.1} parent=11 // pred_fallthru
          _
        // Predicated region
        $region37: #{tpu_custom_call.1} parent=11 // pred_check
          %p271 = pneg %p191
        $region38: #{tpu_custom_call.1} parent=11 // pred_check_branch
          %273 = sbr.rel (%p271) target = $region40
        $region39: #{tpu_custom_call.1} parent=11 // pred_region
          _
        $region40: #{tpu_custom_call.1} parent=11 // pred_fallthru
          _
        // Predicated region
        $region41: #{tpu_custom_call.1} parent=11 // pred_check
          %p274 = pneg %p212
        $region42: #{tpu_custom_call.1} parent=11 // pred_check_branch
          %276 = sbr.rel (%p274) target = $region44
        $region43: #{tpu_custom_call.1} parent=11 // pred_region
          _
        $region44: #{tpu_custom_call.1} parent=11 // pred_fallthru
          _
      $region12: #{tpu_custom_call.1} parent=5 // pred_fallthru
        _
      %p277 = scmp.lt.s32.totalorder %s18, 2
      // Predicated region
      $region45: #{tpu_custom_call.1} parent=5 // pred_check
        %p278 = pneg %p277
      $region46: #{tpu_custom_call.1} parent=5 // pred_check_branch
        %280 = sbr.rel (%p278) target = $region48
      $region47: #{tpu_custom_call.1} parent=5 // pred_region
        // Predicated region
        $region49: #{tpu_custom_call.1} parent=47 // pred_check
          %p281 = pneg %p38
        $region50: #{tpu_custom_call.1} parent=47 // pred_check_branch
          %283 = sbr.rel (%p281) target = $region52
        $region51: #{tpu_custom_call.1} parent=47 // pred_region
          %p284 = scmp.lt.s32.totalorder %s18, 1
          %s285 = scalar_select %p284, %s18, 1
          %s286 = smul.addr %s285, 2
          %s287 = smul.addr %s286, 4
          %s288 = scalar_lea.vmem %s0, %s287
        $region52: #{tpu_custom_call.1} parent=47 // pred_fallthru
          _
      $region48: #{tpu_custom_call.1} parent=5 // pred_fallthru
        _
      %p289 = scmp.le.s32.totalorder 1, %s18
      %p290 = scmp.lt.s32.totalorder %s18, 3
      %p291 = pnand %p289, %p290
      %p292 = pneg %p291
      // Predicated region
      $region53: #{tpu_custom_call.1} parent=5 // pred_check
        _
      $region54: #{tpu_custom_call.1} parent=5 // pred_check_branch
        %294 = sbr.rel (%p291) target = $region56
      $region55: #{tpu_custom_call.1} parent=5 // pred_region
        %s295 = ssub.s32 %s18, 1
        %p296 = scmp.lt.s32.totalorder %s23, 1
        %s297 = scalar_select %p296, %s23, 1
        %s298 = smul.addr %s297, 2
        %s299 = smul.addr %s298, 4
        %s300 = scalar_lea.vmem %s0, %s299
        %p301 = pneg %p44
        %p302 = pneg %p41
        %p303 = pneg %p65
        %p304 = pneg %p62
        %p305 = pneg %p86
        %p306 = pneg %p83
        %p307 = pneg %p107
        %p308 = pneg %p104
        %p309 = pneg %p128
        %p310 = pneg %p125
        %p311 = pneg %p149
        %p312 = pneg %p146
        %p313 = pneg %p170
        %p314 = pneg %p167
        %p315 = pneg %p191
        %p316 = pneg %p188
        %p317 = pneg %p212
        %p318 = pneg %p209
        %p319 = pneg %p238
        %p320 = pneg %p235
        %s321 = sand.u32 %s225, 1
        %s322 = scalar_lea.sflag [#allocation3], %s321
        %s323 = sand.u32 %s225, 1
        %s324 = smul.addr %s323, 64
        %s325 = scalar_lea.vmem [#allocation2], %s324
        %p326 = scmp.lt.s32.totalorder %s23, 1
        %s327 = scalar_select %p326, %s23, 1
        %s328 = smul.addr %s327, 2
        %s329 = smul.addr %s328, 4
        %s330 = scalar_lea.vmem %s0, %s329
        %v331 = vld [vmem:[%s330] sm:$0xff]
        %v332 = vlaneseq
        %v333 = vand.u32 %v332, 127
        %v334 = vadd.s32 %v333, 128
        %vm335 = vcmp.lt.s32.totalorder %v333, 0
        %v336 = vsub.s32 0, %v333
        %v337 = vsel %vm335, %v336, %v333
        %v338 = vshrl.u32 %v337, 4
        %v339 = vand.u32 %v337, 15
        %v340 = vsub.s32 0, %v339
        %v341 = vsel %vm335, %v340, %v339
        %vm342 = vcmp.lt.s32.totalorder %v334, 0
        %v343 = vsub.s32 0, %v334
        %v344 = vsel %vm342, %v343, %v334
        %v345 = vshrl.u32 %v344, 4
        %v346 = vand.u32 %v344, 15
        %v347 = vsub.s32 0, %v346
        %v348 = vsel %vm342, %v347, %v346
        %vm349 = vcmp.ne.s32.totalorder %v341, 0
        %vm350 = vcmp.ne.s32.totalorder %v348, 0
        %vm351 = vcmp.lt.s32.totalorder %v341, 0
        %vm352 = vcmp.lt.s32.totalorder %v348, 0
        %vm353 = vmand %vm351, %vm349
        %vm354 = vmand %vm352, %vm350
        %v355 = vadd.s32 %v341, 16
        %v356 = vadd.s32 %v348, 16
        %v357 = vsel %vm353, %v355, %v341
        %v358 = vsel %vm354, %v356, %v348
        %v359 = vld [vmem:[%s1] sm:$0xff]
        %v360 = vld [vmem:[%s2] sm:$0xff]
        %362 = vset.pattern.permute.xlu0 0
        %363 = vperm.xlu0 %362, %v360
        %v364 = vpop.permute.xlu0 %363
        %367 = vst [vmem:[#allocation1] ss:$2 sm:$0xff] %v331
        %v368 = vld.sshfl [vmem:[#allocation1] sm:$0xff pattern:$0x75316420]
        %v369 = vld.sshfl [vmem:[#allocation1 + $0x8] sm:$0xff pattern:$0x75316420]
        %vm370 = vcmask 31744
        %v372 = vsel %vm370, %v359, 0
        %vm374 = vcmask 1043456
        %v375 = vsel %vm374, %v368, 0
        %v377 = vsel %vm374, %v369, 0
        %379 = vmatpush.msra.mxu0 0.0
        %380 = vmatpush.msra.mxu0 0.0
        %381 = vmatpush.msra.mxu0 0.0
        %382 = vmatpush.msra.mxu0 0.0
        %383 = vmatpush.msra.mxu0 0.0
        %384 = vmatpush.msra.mxu0 0.0
        %385 = vmatpush.msra.mxu0 0.0
        %386 = vmatpush.msra.mxu0 0.0
        %387 = vmatpush.msra.mxu0 0.0
        %388 = vmatpush.msra.mxu0 0.0
        %389 = vmatpush.msra.mxu0 0.0
        %390 = vmatpush.msra.mxu0 0.0
        %391 = vmatpush.msra.mxu0 0.0
        %392 = vmatpush.msra.mxu0 0.0
        %393 = vmatpush.msra.mxu0 0.0
        %394 = vmatpush.msra.mxu0 %v375
        %395 = vmatmul.f32.gmra.mxu0 %v372
        %v396 = vpop.f32.mrf.mxu0
        %v397 = vadd.f32 %v364, %v396
        %398 = vdwg.mxu0
        %399 = vmatpush.msra.mxu0 0.0
        %400 = vmatpush.msra.mxu0 0.0
        %401 = vmatpush.msra.mxu0 0.0
        %402 = vmatpush.msra.mxu0 0.0
        %403 = vmatpush.msra.mxu0 0.0
        %404 = vmatpush.msra.mxu0 0.0
        %405 = vmatpush.msra.mxu0 0.0
        %406 = vmatpush.msra.mxu0 0.0
        %407 = vmatpush.msra.mxu0 0.0
        %408 = vmatpush.msra.mxu0 0.0
        %409 = vmatpush.msra.mxu0 0.0
        %410 = vmatpush.msra.mxu0 0.0
        %411 = vmatpush.msra.mxu0 0.0
        %412 = vmatpush.msra.mxu0 0.0
        %413 = vmatpush.msra.mxu0 0.0
        %414 = vmatpush.msra.mxu0 %v377
        %415 = vmatmul.f32.gmra.mxu0 %v372
        %v416 = vpop.f32.mrf.mxu0
        %v417 = vadd.f32 %v364, %v416
        %418 = vdwg.mxu0
        %v419 = vmax.f32 %v397, 0.0
        %v420 = vmax.f32 %v417, 0.0
        %vm421 = vcmp.ge.s32.totalorder %v333, 16
        %vm422 = vcmp.ge.s32.totalorder %v334, 16
        %423 = vrot.lane.b32.xlu0 %v419, 16
        %v424 = vpop.permute.xlu0 %423
        %425 = vrot.lane.b32.xlu0 %v420, 16
        %v426 = vpop.permute.xlu0 %425
        %vm427 = vcmp.lt.s32.totalorder %v333, 16
        %v428 = vsel %vm427, %v424, %v426
        %v429 = vsel %vm427, %v426, %v424
        %v430 = vsel %vm421, %v429, 0.0
        %v431 = vsel %vm422, %v428, 0.0
        %vm432 = vcmp.lt.s32.totalorder %v333, 240
        %vm433 = vcmp.lt.s32.totalorder %v334, 240
        %434 = vrot.lane.b32.xlu0 %v419, 112
        %v435 = vpop.permute.xlu0 %434
        %436 = vrot.lane.b32.xlu0 %v420, 112
        %v437 = vpop.permute.xlu0 %436
        %vm438 = vcmp.lt.s32.totalorder %v333, 112
        %v439 = vsel %vm438, %v435, %v437
        %v440 = vsel %vm438, %v437, %v435
        %v441 = vsel %vm432, %v439, 0.0
        %v442 = vsel %vm433, %v440, 0.0
        %v443 = vld [vmem:[%s3] sm:$0xff]
        %v444 = vld [vmem:[%s4] sm:$0xff]
        %446 = vset.pattern.permute.xlu0 0
        %447 = vperm.xlu0 %446, %v444
        %v448 = vpop.permute.xlu0 %447
        %vm450 = vcmask 195584
        %v452 = vsel %vm450, %v443, 0
        %454 = vmatpush.msra.mxu0 0.0
        %455 = vmatpush.msra.mxu0 0.0
        %456 = vmatpush.msra.mxu0 0.0
        %457 = vmatpush.msra.mxu0 0.0
        %458 = vmatpush.msra.mxu0 0.0
        %459 = vmatpush.msra.mxu0 0.0
        %460 = vmatpush.msra.mxu0 0.0
        %461 = vmatpush.msra.mxu0 0.0
        %462 = vmatpush.msra.mxu0 0.0
        %463 = vmatpush.msra.mxu0 0.0
        %464 = vmatpush.msra.mxu0 0.0
        %465 = vmatpush.msra.mxu0 0.0
        %466 = vmatpush.msra.mxu0 0.0
        %467 = vmatpush.msra.mxu0 %v441
        %468 = vmatpush.msra.mxu0 %v419
        %469 = vmatpush.msra.mxu0 %v430
        %470 = vmatmul.f32.gmra.mxu0 %v452
        %v471 = vpop.f32.mrf.mxu0
        %v472 = vadd.f32 %v448, %v471
        %473 = vdwg.mxu0
        %474 = vmatpush.msra.mxu0 0.0
        %475 = vmatpush.msra.mxu0 0.0
        %476 = vmatpush.msra.mxu0 0.0
        %477 = vmatpush.msra.mxu0 0.0
        %478 = vmatpush.msra.mxu0 0.0
        %479 = vmatpush.msra.mxu0 0.0
        %480 = vmatpush.msra.mxu0 0.0
        %481 = vmatpush.msra.mxu0 0.0
        %482 = vmatpush.msra.mxu0 0.0
        %483 = vmatpush.msra.mxu0 0.0
        %484 = vmatpush.msra.mxu0 0.0
        %485 = vmatpush.msra.mxu0 0.0
        %486 = vmatpush.msra.mxu0 0.0
        %487 = vmatpush.msra.mxu0 %v442
        %488 = vmatpush.msra.mxu0 %v420
        %489 = vmatpush.msra.mxu0 %v431
        %490 = vmatmul.f32.gmra.mxu0 %v452
        %v491 = vpop.f32.mrf.mxu0
        %v492 = vadd.f32 %v448, %v491
        %493 = vdwg.mxu0
        %v494 = vmax.f32 %v472, 0.0
        %v495 = vmax.f32 %v492, 0.0
        %vm496 = vcmp.ne.s32.totalorder %v357, 0
        %vm497 = vcmp.ne.s32.totalorder %v358, 0
        %498 = vrot.lane.b32.xlu0 %v494, 1
        %v499 = vpop.permute.xlu0 %498
        %500 = vrot.lane.b32.xlu0 %v495, 1
        %v501 = vpop.permute.xlu0 %500
        %vm502 = vcmp.lt.s32.totalorder %v333, 1
        %v503 = vsel %vm502, %v499, %v501
        %v504 = vsel %vm502, %v501, %v499
        %v505 = vsel %vm496, %v504, 0.0
        %v506 = vsel %vm497, %v503, 0.0
        %vm507 = vcmp.ne.s32.totalorder %v357, 15
        %vm508 = vcmp.ne.s32.totalorder %v358, 15
        %509 = vrot.lane.b32.xlu0 %v494, 127
        %v510 = vpop.permute.xlu0 %509
        %511 = vrot.lane.b32.xlu0 %v495, 127
        %v512 = vpop.permute.xlu0 %511
        %vm513 = vcmp.lt.s32.totalorder %v333, 127
        %v514 = vsel %vm513, %v510, %v512
        %v515 = vsel %vm513, %v512, %v510
        %v516 = vsel %vm507, %v514, 0.0
        %v517 = vsel %vm508, %v515, 0.0
        %v518 = vld [vmem:[%s5] sm:$0xff]
        %v519 = vld [vmem:[%s6] sm:$0xff]
        %521 = vset.pattern.permute.xlu0 0
        %522 = vperm.xlu0 %521, %v519
        %v523 = vpop.permute.xlu0 %522
        %v526 = vsel %vm450, %v518, 0
        %528 = vmatpush.msra.mxu0 0.0
        %529 = vmatpush.msra.mxu0 0.0
        %530 = vmatpush.msra.mxu0 0.0
        %531 = vmatpush.msra.mxu0 0.0
        %532 = vmatpush.msra.mxu0 0.0
        %533 = vmatpush.msra.mxu0 0.0
        %534 = vmatpush.msra.mxu0 0.0
        %535 = vmatpush.msra.mxu0 0.0
        %536 = vmatpush.msra.mxu0 0.0
        %537 = vmatpush.msra.mxu0 0.0
        %538 = vmatpush.msra.mxu0 0.0
        %539 = vmatpush.msra.mxu0 0.0
        %540 = vmatpush.msra.mxu0 0.0
        %541 = vmatpush.msra.mxu0 %v516
        %542 = vmatpush.msra.mxu0 %v494
        %543 = vmatpush.msra.mxu0 %v505
        %544 = vmatmul.f32.gmra.mxu0 %v526
        %v545 = vpop.f32.mrf.mxu0
        %v546 = vadd.f32 %v523, %v545
        %547 = vdwg.mxu0
        %548 = vmatpush.msra.mxu0 0.0
        %549 = vmatpush.msra.mxu0 0.0
        %550 = vmatpush.msra.mxu0 0.0
        %551 = vmatpush.msra.mxu0 0.0
        %552 = vmatpush.msra.mxu0 0.0
        %553 = vmatpush.msra.mxu0 0.0
        %554 = vmatpush.msra.mxu0 0.0
        %555 = vmatpush.msra.mxu0 0.0
        %556 = vmatpush.msra.mxu0 0.0
        %557 = vmatpush.msra.mxu0 0.0
        %558 = vmatpush.msra.mxu0 0.0
        %559 = vmatpush.msra.mxu0 0.0
        %560 = vmatpush.msra.mxu0 0.0
        %561 = vmatpush.msra.mxu0 %v517
        %562 = vmatpush.msra.mxu0 %v495
        %563 = vmatpush.msra.mxu0 %v506
        %564 = vmatmul.f32.gmra.mxu0 %v526
        %v565 = vpop.f32.mrf.mxu0
        %v566 = vadd.f32 %v523, %v565
        %567 = vdwg.mxu0
        %v568 = vmax.f32 %v546, 0.0
        %v569 = vmax.f32 %v566, 0.0
        %v570 = vld [vmem:[%s7] sm:$0xff]
        %v571 = vld [vmem:[%s7 + $0x8] sm:$0xff]
        %v572 = vld [vmem:[%s7 + $0x10] sm:$0xff]
        %v573 = vld [vmem:[%s7 + $0x18] sm:$0xff]
        %v574 = vld [vmem:[%s8] sm:$0xff]
        %v575 = vld [vmem:[%s8 + $0x8] sm:$0xff]
        %v576 = vld [vmem:[%s8 + $0x10] sm:$0xff]
        %v577 = vld [vmem:[%s8 + $0x18] sm:$0xff]
        %579 = vset.pattern.permute.xlu0 0
        %580 = vperm.xlu0 %579, %v574
        %v581 = vpop.permute.xlu0 %580
        %584 = vset.pattern.permute.xlu0 0
        %585 = vperm.xlu0 %584, %v575
        %v586 = vpop.permute.xlu0 %585
        %589 = vset.pattern.permute.xlu0 0
        %590 = vperm.xlu0 %589, %v576
        %v591 = vpop.permute.xlu0 %590
        %594 = vset.pattern.permute.xlu0 0
        %595 = vperm.xlu0 %594, %v577
        %v596 = vpop.permute.xlu0 %595
        %vm598 = vcmask 64512
        %v600 = vsel %vm598, %v570, 0
        %v603 = vsel %vm598, %v571, 0
        %v606 = vsel %vm598, %v572, 0
        %v609 = vsel %vm598, %v573, 0
        %611 = vmatpush.msra.mxu0 0.0
        %612 = vmatpush.msra.mxu0 0.0
        %613 = vmatpush.msra.mxu0 0.0
        %614 = vmatpush.msra.mxu0 0.0
        %615 = vmatpush.msra.mxu0 0.0
        %616 = vmatpush.msra.mxu0 0.0
        %617 = vmatpush.msra.mxu0 0.0
        %618 = vmatpush.msra.mxu0 0.0
        %619 = vmatpush.msra.mxu0 0.0
        %620 = vmatpush.msra.mxu0 0.0
        %621 = vmatpush.msra.mxu0 0.0
        %622 = vmatpush.msra.mxu0 0.0
        %623 = vmatpush.msra.mxu0 0.0
        %624 = vmatpush.msra.mxu0 0.0
        %625 = vmatpush.msra.mxu0 0.0
        %626 = vmatpush.msra.mxu0 %v568
        %627 = vmatmul.f32.gmra.mxu0 %v600
        %v628 = vpop.f32.mrf.mxu0
        %v629 = vadd.f32 %v581, %v628
        %630 = vmatmul.f32.gmra.mxu0 %v603
        %v631 = vpop.f32.mrf.mxu0
        %v632 = vadd.f32 %v586, %v631
        %633 = vmatmul.f32.gmra.mxu0 %v606
        %v634 = vpop.f32.mrf.mxu0
        %v635 = vadd.f32 %v591, %v634
        %636 = vmatmul.f32.gmra.mxu0 %v609
        %v637 = vpop.f32.mrf.mxu0
        %v638 = vadd.f32 %v596, %v637
        %639 = vdwg.mxu0
        %640 = vmatpush.msra.mxu0 0.0
        %641 = vmatpush.msra.mxu0 0.0
        %642 = vmatpush.msra.mxu0 0.0
        %643 = vmatpush.msra.mxu0 0.0
        %644 = vmatpush.msra.mxu0 0.0
        %645 = vmatpush.msra.mxu0 0.0
        %646 = vmatpush.msra.mxu0 0.0
        %647 = vmatpush.msra.mxu0 0.0
        %648 = vmatpush.msra.mxu0 0.0
        %649 = vmatpush.msra.mxu0 0.0
        %650 = vmatpush.msra.mxu0 0.0
        %651 = vmatpush.msra.mxu0 0.0
        %652 = vmatpush.msra.mxu0 0.0
        %653 = vmatpush.msra.mxu0 0.0
        %654 = vmatpush.msra.mxu0 0.0
        %655 = vmatpush.msra.mxu0 %v569
        %656 = vmatmul.f32.gmra.mxu0 %v600
        %v657 = vpop.f32.mrf.mxu0
        %v658 = vadd.f32 %v581, %v657
        %659 = vmatmul.f32.gmra.mxu0 %v603
        %v660 = vpop.f32.mrf.mxu0
        %v661 = vadd.f32 %v586, %v660
        %662 = vmatmul.f32.gmra.mxu0 %v606
        %v663 = vpop.f32.mrf.mxu0
        %v664 = vadd.f32 %v591, %v663
        %665 = vmatmul.f32.gmra.mxu0 %v609
        %v666 = vpop.f32.mrf.mxu0
        %v667 = vadd.f32 %v596, %v666
        %668 = vdwg.mxu0
        %669 = vst [vmem:[%s325] sm:$0xff] %v629
        %670 = vst [vmem:[%s325 + $0x8] sm:$0xff] %v658
        %671 = vst [vmem:[%s325 + $0x10] sm:$0xff] %v632
        %672 = vst [vmem:[%s325 + $0x18] sm:$0xff] %v661
        %673 = vst [vmem:[%s325 + $0x20] sm:$0xff] %v635
        %674 = vst [vmem:[%s325 + $0x28] sm:$0xff] %v664
        %675 = vst [vmem:[%s325 + $0x30] sm:$0xff] %v638
        %676 = vst [vmem:[%s325 + $0x38] sm:$0xff] %v667
        %s677 = sand.u32 %s225, 1
        %s678 = scalar_lea.sflag [#allocation3], %s677
        %s679 = sand.u32 %s225, 1
        %s680 = smul.addr %s679, 64
        %s681 = scalar_lea.vmem [#allocation2], %s680
        // Predicated region
        $region57: #{tpu_custom_call.1} parent=55 // pred_check
          %p682 = pneg %p235
        $region58: #{tpu_custom_call.1} parent=55 // pred_check_branch
          %684 = sbr.rel (%p682) target = $region60
        $region59: #{tpu_custom_call.1} parent=55 // pred_region
          %686 = vsyncadd %s678, 0
          %s687 = smul.addr %s23, 8
          %s688 = smul.addr %s687, 8
          %s689 = scalar_lea.hbm %s9, %s688
          %s690 = sshll.u32 %s681, 4
          %s691 = int_to_ptr.vmem [resolvable:$true] %s690
          %s692 = sshll.u32 %s689, 4
          %s693 = int_to_ptr.hbm [resolvable:$true] %s692
          %698 = dma.vmem_to_hbm [thread:$0]  %s691, 1024, %s693, %s678, 256, 256, 16
        $region60: #{tpu_custom_call.1} parent=55 // pred_fallthru
          _
      $region56: #{tpu_custom_call.1} parent=5 // pred_fallthru
        _
      %p699 = scmp.le.s32.totalorder 2, %s18
      // Predicated region
      $region61: #{tpu_custom_call.1} parent=5 // pred_check
        %p700 = pneg %p699
      $region62: #{tpu_custom_call.1} parent=5 // pred_check_branch
        %702 = sbr.rel (%p700) target = $region64
      $region63: #{tpu_custom_call.1} parent=5 // pred_region
        %s703 = ssub.s32 %s18, 2
        // Predicated region
        $region65: #{tpu_custom_call.1} parent=63 // pred_check
          %p704 = pneg %p241
        $region66: #{tpu_custom_call.1} parent=63 // pred_check_branch
          %706 = sbr.rel (%p704) target = $region68
        $region67: #{tpu_custom_call.1} parent=63 // pred_region
          %s707 = sand.u32 %s226, 1
          %s708 = scalar_lea.sflag [#allocation3], %s707
          %s709 = sand.u32 %s226, 1
          %s710 = smul.addr %s709, 64
          %s711 = scalar_lea.vmem [#allocation2], %s710
          %713 = dma.done %s708, 1024
        $region68: #{tpu_custom_call.1} parent=63 // pred_fallthru
          _
      $region64: #{tpu_custom_call.1} parent=5 // pred_fallthru
        _
    $region6: #{tpu_custom_call.1} parent=1 // loop_footer
      %s22 = sadd.s32 1, %s18
    $region7: #{tpu_custom_call.1} parent=1 // loop_footer_branch
      %17 = sbr.rel target = $region3
    $region8: #{tpu_custom_call.1} parent=1 // loop_exit
      _
    %714 = vsyncpa [#allocation3], 1
    %s715 = scalar_lea.sflag [#allocation3], 1
    %716 = vsyncpa %s715, 1

</llo_original>
